<compile_context>
chip_gen: v6e
topology: v6e:2x2x1
jax: 0.10.0
libtpu: 0.0.40
codegen_flags: <defaults>
</compile_context>

<pallas_src>
import jax
import jax.numpy as jnp
from jax import lax
from jax.experimental import pallas as pl
from jax.experimental.pallas import tpu as pltpu

_EPS = 1e-5
_NEG_SLOPE = 0.2


def _vmem_limit_bytes():
    try:
        kind = jax.devices()[0].device_kind.lower()
    except Exception:
        kind = ""
    if "v7" in kind:
        return 48 * 1024 * 1024      # 64 MiB physical per v7x TensorCore: leave headroom
    return 96 * 1024 * 1024          # v5e / v6e: 128 MiB physical


def _conv_geometry(x_shape, w_shape):
    N, C_in, H, W = x_shape
    C_out = w_shape[0]
    Ho = (H + 2 - 4) // 2 + 1
    Wo = (W + 2 - 4) // 2 + 1
    return N, C_in, C_out, Ho, Wo


def _build_xcol(x, Nb):
    """Reflect pad + 16-tap re-layout: [N,C,H,W] -> [N//Nb, 16*C, Nb*Ho*Wo] in bf16."""
    N, C_in, H, W = x.shape
    Ho = (H + 2 - 4) // 2 + 1
    Wo = (W + 2 - 4) // 2 + 1
    P = Ho * Wo
    xp = jnp.pad(x.astype(jnp.bfloat16), ((0, 0), (0, 0), (1, 1), (1, 1)), mode="reflect")
    pieces = []
    for kh in range(4):
        for kw in range(4):
            pieces.append(
                xp[:, :, kh:kh + 2 * (Ho - 1) + 1:2, kw:kw + 2 * (Wo - 1) + 1:2]
            )  # [N, C_in, Ho, Wo] == xp[n, c, 2a+kh, 2j+kw]
    cols = jnp.stack(pieces, axis=1)                       # [N, 16, C_in, Ho, Wo]
    G = N // Nb
    cols = cols.reshape(G, Nb, 16 * C_in, P)               # merge taps x C_in, flatten spatial
    cols = cols.transpose(0, 2, 1, 3).reshape(G, 16 * C_in, Nb * P)
    return cols


# ---------------------------------------------------------------------------
# Fused path: one block per batch group; conv + InstanceNorm + LeakyReLU in-kernel.
# ---------------------------------------------------------------------------
def _fused_forward(xcol, w16, C_out, Nb, P, vmem_limit):
    G, K16, L = xcol.shape
    inv_p = 1.0 / float(P)

    def kernel(x_ref, w_ref, o_ref):
        # x_ref: [K16, L] bf16 ; w_ref: [C_out, K16] bf16
        y = jnp.dot(w_ref[...], x_ref[...], preferred_element_type=jnp.float32)  # [C_out, L]
        if Nb == 1:
            mean = jnp.sum(y, axis=1, keepdims=True) * inv_p
            ex2 = jnp.sum(y * y, axis=1, keepdims=True) * inv_p
            rstd = lax.rsqrt(jnp.maximum(ex2 - mean * mean, 0.0) + _EPS)
            yn = (y - mean) * rstd
        else:
            # Per-instance stats over static lane segments (instance n owns lanes [n*P,(n+1)*P)).
            lane = lax.broadcasted_iota(jnp.int32, (C_out, L), 1)
            yn = jnp.zeros_like(y)
            for n in range(Nb):
                m = (lane >= n * P) & (lane < (n + 1) * P)
                ym = jnp.where(m, y, 0.0)
                mean = jnp.sum(ym, axis=1, keepdims=True) * inv_p
                ex2 = jnp.sum(ym * ym, axis=1, keepdims=True) * inv_p
                rstd = lax.rsqrt(jnp.maximum(ex2 - mean * mean, 0.0) + _EPS)
                yn = yn + jnp.where(m, (y - mean) * rstd, 0.0)
        o_ref[...] = jnp.maximum(yn, _NEG_SLOPE * yn).astype(o_ref.dtype)

    return pl.pallas_call(
        kernel,
        out_shape=jax.ShapeDtypeStruct((G, C_out, L), jnp.bfloat16),
        grid_spec=pltpu.PrefetchScalarGridSpec(
            num_scalar_prefetch=0,
            grid=(G,),
            in_specs=[
                pl.BlockSpec((None, K16, L), lambda g: (g, 0, 0)),
                pl.BlockSpec((C_out, K16), lambda g: (0, 0)),
            ],
            out_specs=pl.BlockSpec((None, C_out, L), lambda g: (g, 0, 0)),
        ),
        compiler_params=pltpu.CompilerParams(
            dimension_semantics=("parallel",),
            vmem_limit_bytes=vmem_limit,
        ),
    )(xcol, w16)


# ---------------------------------------------------------------------------
# P-tiled two-pass path for large feature maps (v7x VMEM budget):
#   pass A: conv, write raw y (bf16), accumulate sum/sumsq across the 'arbitrary' P axis
#   pass B: (y - mean) * rstd, LeakyReLU
# ---------------------------------------------------------------------------
def _tiled_forward(xcol, w16, C_out, P, Pt, vmem_limit):
    N, K16, _ = xcol.shape
    n_pt = P // Pt
    inv_p = 1.0 / float(P)

    def conv_stats_kernel(x_ref, w_ref, y_ref, mean_ref, rstd_ref, s1_ref, s2_ref):
        t = pl.program_id(1)

        @pl.when(t == 0)
        def _():
            s1_ref[...] = jnp.zeros_like(s1_ref)
            s2_ref[...] = jnp.zeros_like(s2_ref)

        y = jnp.dot(w_ref[...], x_ref[...], preferred_element_type=jnp.float32)  # [C_out, Pt]
        s1_ref[...] += jnp.sum(y, axis=1, keepdims=True)
        s2_ref[...] += jnp.sum(y * y, axis=1, keepdims=True)
        y_ref[...] = y.astype(y_ref.dtype)

        @pl.when(t == pl.num_programs(1) - 1)
        def _():
            mean = s1_ref[...] * inv_p
            var = jnp.maximum(s2_ref[...] * inv_p - mean * mean, 0.0)
            mean_ref[...] = mean
            rstd_ref[...] = lax.rsqrt(var + _EPS)

    y_raw, mean, rstd = pl.pallas_call(
        conv_stats_kernel,
        out_shape=(
            jax.ShapeDtypeStruct((N, C_out, P), jnp.bfloat16),
            jax.ShapeDtypeStruct((N, C_out, 1), jnp.float32),
            jax.ShapeDtypeStruct((N, C_out, 1), jnp.float32),
        ),
        grid_spec=pltpu.PrefetchScalarGridSpec(
            num_scalar_prefetch=0,
            grid=(N, n_pt),
            in_specs=[
                pl.BlockSpec((None, K16, Pt), lambda n, t: (n, 0, t)),
                pl.BlockSpec((C_out, K16), lambda n, t: (0, 0)),
            ],
            out_specs=[
                pl.BlockSpec((None, C_out, Pt), lambda n, t: (n, 0, t)),
                pl.BlockSpec((None, C_out, 1), lambda n, t: (n, 0, 0)),
                pl.BlockSpec((None, C_out, 1), lambda n, t: (n, 0, 0)),
            ],
            scratch_shapes=[
                pltpu.VMEM((C_out, 1), jnp.float32),
                pltpu.VMEM((C_out, 1), jnp.float32),
            ],
        ),
        compiler_params=pltpu.CompilerParams(
            dimension_semantics=("parallel", "arbitrary"),
            vmem_limit_bytes=vmem_limit,
        ),
    )(xcol, w16)

    def norm_lrelu_kernel(y_ref, mean_ref, rstd_ref, o_ref):
        yn = (y_ref[...].astype(jnp.float32) - mean_ref[...]) * rstd_ref[...]
        o_ref[...] = jnp.maximum(yn, _NEG_SLOPE * yn).astype(o_ref.dtype)

    out = pl.pallas_call(
        norm_lrelu_kernel,
        out_shape=jax.ShapeDtypeStruct((N, C_out, P), jnp.bfloat16),
        grid_spec=pltpu.PrefetchScalarGridSpec(
            num_scalar_prefetch=0,
            grid=(N, n_pt),
            in_specs=[
                pl.BlockSpec((None, C_out, Pt), lambda n, t: (n, 0, t)),
                pl.BlockSpec((None, C_out, 1), lambda n, t: (n, 0, 0)),
                pl.BlockSpec((None, C_out, 1), lambda n, t: (n, 0, 0)),
            ],
            out_specs=pl.BlockSpec((None, C_out, Pt), lambda n, t: (n, 0, t)),
        ),
        compiler_params=pltpu.CompilerParams(
            dimension_semantics=("parallel", "parallel"),
            vmem_limit_bytes=vmem_limit,
        ),
    )(y_raw, mean, rstd)
    return out


# ---------------------------------------------------------------------------
# Public wrapper
# ---------------------------------------------------------------------------
def g_down_block_pallas(x, weight, bias=None, *, force_path=None, max_pt=8192):
    """x: [N, C_in, H, W], weight: [C_out, C_in, 4, 4].

    bias is accepted but unused: a per-channel constant added before
    InstanceNorm2d(affine=False) cancels exactly in (y - mean) * rstd.
    """
    del bias
    # TODO(synk): norm=False variant (conv bias + LeakyReLU, no InstanceNorm) not implemented.
    N, C_in, C_out, Ho, Wo = _conv_geometry(x.shape, weight.shape)
    P = Ho * Wo
    K16 = 16 * C_in

    vmem_limit = _vmem_limit_bytes()
    w16 = weight.transpose(0, 2, 3, 1).reshape(C_out, K16).astype(jnp.bfloat16)

    # P tile for the tiled path: largest multiple-of-128 divisor of P <= max_pt.
    Pt = 0
    d = 128
    while d <= min(P, max_pt):
        if P % d == 0:
            Pt = d
        d += 128

    if force_path == "tiled":
        use_tiled = Pt > 0
    elif force_path == "fused":
        use_tiled = False
    else:
        # fused-block VMEM estimate: 2x xcol buf + 2x out buf + f32 temps + weights
        est = 2 * (K16 * P * 2) + 2 * (C_out * P * 2) + 8 * (C_out * P * 4) + C_out * K16 * 2
        use_tiled = (Pt > 0) and (est > vmem_limit // 2)
    # TODO(synk): P with no multiple-of-128 divisor always falls back to the fused path.

    if use_tiled:
        xcol = _build_xcol(x, 1)                              # [N, K16, P]
        out = _tiled_forward(xcol, w16, C_out, P, Pt, vmem_limit)
        return out.reshape(N, C_out, Ho, Wo)

    # Fused path: fold Nb batch instances onto lanes when P alone is lane-sparse.
    Nb = 1
    if P % 128 != 0:
        for cand in range(1, N + 1):
            if N % cand == 0 and cand * P >= 128:
                Nb = cand
                break
        else:
            Nb = N
    G = N // Nb
    xcol = _build_xcol(x, Nb)                                 # [G, K16, Nb*P]
    out = _fused_forward(xcol, w16, C_out, Nb, P, vmem_limit)  # [G, C_out, Nb*P]
    out = out.reshape(G, C_out, Nb, Ho, Wo).transpose(0, 2, 1, 3, 4)
    return out.reshape(N, C_out, Ho, Wo)


# ---------------------------------------------------------------------------
# Pure-JAX f32 reference for validation
# ---------------------------------------------------------------------------
def g_down_block_ref(x, weight, bias):
    xp = jnp.pad(x, ((0, 0), (0, 0), (1, 1), (1, 1)), mode="reflect").astype(jnp.float32)
    y = lax.conv_general_dilated(
        xp, weight.astype(jnp.float32),
        window_strides=(2, 2), padding="VALID",
        dimension_numbers=("NCHW", "OIHW", "NCHW"),
    ) + bias.astype(jnp.float32)[None, :, None, None]
    mean = y.mean(axis=(2, 3), keepdims=True)
    var = ((y - mean) ** 2).mean(axis=(2, 3), keepdims=True)   # biased, like InstanceNorm2d
    y_n = (y - mean) / jnp.sqrt(var + 1e-5)
    return jnp.where(y_n >= 0, y_n, 0.2 * y_n)


if __name__ == "__main__":
    key = jax.random.PRNGKey(0)
    k_x, k_w, k_b, k_x2, k_w2 = jax.random.split(key, 5)

    # Case 1: small shapes -> fused path, batch folded onto the lane axis (L = 2*64 = 128).
    N, C_in, H, W, C_out = 2, 4, 16, 16, 8
    x = jax.random.normal(k_x, (N, C_in, H, W), dtype=jnp.float32)
    w = 0.1 * jax.random.normal(k_w, (C_out, C_in, 4, 4), dtype=jnp.float32)
    b = 0.1 * jax.random.normal(k_b, (C_out,), dtype=jnp.float32)

    out = jax.block_until_ready(g_down_block_pallas(x, w, b))
    ref = g_down_block_ref(x, w, b)
    assert out.shape == (N, C_out, H // 2, W // 2), out.shape
    # bf16 matmul inputs + bf16 output vs f32 reference -> relaxed tolerance (values are O(1)).
    err = float(jnp.abs(out.astype(jnp.float32) - ref).max())
    assert jnp.allclose(out.astype(jnp.float32), ref, atol=1e-1, rtol=1e-1), err

    # Case 2: larger map, force the P-tiled two-pass path (stats accumulated across 4 P-tiles).
    N2, C_in2, H2, W2, C_out2 = 2, 8, 64, 64, 16
    x2 = jax.random.normal(k_x2, (N2, C_in2, H2, W2), dtype=jnp.float32)
    w2 = 0.1 * jax.random.normal(k_w2, (C_out2, C_in2, 4, 4), dtype=jnp.float32)
    out2 = jax.block_until_ready(
        g_down_block_pallas(x2, w2, None, force_path="tiled", max_pt=256))
    ref2 = g_down_block_ref(x2, w2, jnp.zeros((C_out2,), jnp.float32))
    assert out2.shape == (N2, C_out2, H2 // 2, W2 // 2), out2.shape
    err2 = float(jnp.abs(out2.astype(jnp.float32) - ref2).max())
    assert jnp.allclose(out2.astype(jnp.float32), ref2, atol=1e-1, rtol=1e-1), err2

    print("KERNEL_OK")
</pallas_src>

<mosaic_0001>
module attributes {stable_mosaic.version = 11 : i64} {
  func.func @kernel(%arg0: i32, %arg1: memref<1x64x128xbf16, #tpu.memory_space<vmem>>, %arg2: memref<8x64xbf16, #tpu.memory_space<vmem>>, %arg3: memref<1x8x128xbf16, #tpu.memory_space<vmem>>) attributes {dimension_semantics = [#tpu.dimension_semantics<parallel>], iteration_bounds = array<i64: 1>, scalar_prefetch = 0 : i64, scratch_operands = 0 : i64, tpu.core_type = #tpu.core_type<tc>, window_params = [{transform_indices = @transform_0, window_bounds = array<i64: 1, 64, 128>}, {pipeline_mode = #tpu.pipeline_mode<synchronous>, transform_indices = @transform_1, window_bounds = array<i64: 8, 64>}, {transform_indices = @transform_2, window_bounds = array<i64: 1, 8, 128>}]} {
    %c0 = arith.constant 0 : index
    %c0_0 = arith.constant 0 : index
    %0 = vector.load %arg2[%c0, %c0_0] : memref<8x64xbf16, #tpu.memory_space<vmem>>, vector<8x64xbf16>
    %c0_1 = arith.constant 0 : index
    %c0_2 = arith.constant 0 : index
    %c0_3 = arith.constant 0 : index
    %1 = vector.load %arg1[%c0_1, %c0_2, %c0_3] : memref<1x64x128xbf16, #tpu.memory_space<vmem>>, vector<1x64x128xbf16>
    %2 = vector.shape_cast %1 : vector<1x64x128xbf16> to vector<64x128xbf16>
    %cst = arith.constant dense<0.000000e+00> : vector<8x128xf32>
    %3 = tpu.matmul %0, %2, %cst {dimension_numbers = #tpu.dot_dimension_numbers<[1], [0], [0], [1], [0, 0, 1, 1], [], []>} : vector<8x64xbf16>, vector<64x128xbf16>, vector<8x128xf32> -> vector<8x128xf32>
    %4 = tpu.iota {dimensions = array<i32: 1>} : vector<8x128xi32>
    %cst_4 = arith.constant 0.000000e+00 : f32
    %5 = vector.broadcast %cst_4 : f32 to vector<8x128xf32>
    %c0_i32 = arith.constant 0 : i32
    %6 = vector.broadcast %c0_i32 : i32 to vector<8x128xi32>
    %7 = arith.cmpi sge, %4, %6 : vector<8x128xi32>
    %c64_i32 = arith.constant 64 : i32
    %8 = vector.broadcast %c64_i32 : i32 to vector<8x128xi32>
    %9 = arith.cmpi slt, %4, %8 : vector<8x128xi32>
    %10 = arith.andi %7, %9 : vector<8x128xi1>
    %cst_5 = arith.constant 0.000000e+00 : f32
    %11 = vector.broadcast %cst_5 : f32 to vector<8x128xf32>
    %12 = arith.select %10, %3, %11 : vector<8x128xi1>, vector<8x128xf32>
    %cst_6 = arith.constant dense<0.000000e+00> : vector<8xf32>
    %13 = vector.multi_reduction <add>, %12, %cst_6 [1] : vector<8x128xf32> to vector<8xf32>
    %14 = vector.shape_cast %13 : vector<8xf32> to vector<8x1xf32>
    %cst_7 = arith.constant 1.562500e-02 : f32
    %15 = vector.broadcast %cst_7 : f32 to vector<8x1xf32>
    %16 = arith.mulf %14, %15 : vector<8x1xf32>
    %17 = arith.mulf %12, %12 : vector<8x128xf32>
    %cst_8 = arith.constant dense<0.000000e+00> : vector<8xf32>
    %18 = vector.multi_reduction <add>, %17, %cst_8 [1] : vector<8x128xf32> to vector<8xf32>
    %19 = vector.shape_cast %18 : vector<8xf32> to vector<8x1xf32>
    %cst_9 = arith.constant 1.562500e-02 : f32
    %20 = vector.broadcast %cst_9 : f32 to vector<8x1xf32>
    %21 = arith.mulf %19, %20 : vector<8x1xf32>
    %22 = arith.mulf %16, %16 : vector<8x1xf32>
    %23 = arith.subf %21, %22 : vector<8x1xf32>
    %cst_10 = arith.constant 0.000000e+00 : f32
    %24 = vector.broadcast %cst_10 : f32 to vector<8x1xf32>
    %25 = arith.maximumf %23, %24 : vector<8x1xf32>
    %cst_11 = arith.constant 9.99999974E-6 : f32
    %26 = vector.broadcast %cst_11 : f32 to vector<8x1xf32>
    %27 = arith.addf %25, %26 : vector<8x1xf32>
    %28 = math.rsqrt %27 : vector<8x1xf32>
    %29 = vector.broadcast %16 : vector<8x1xf32> to vector<8x128xf32>
    %30 = arith.subf %3, %29 : vector<8x128xf32>
    %31 = vector.broadcast %28 : vector<8x1xf32> to vector<8x128xf32>
    %32 = arith.mulf %30, %31 : vector<8x128xf32>
    %cst_12 = arith.constant 0.000000e+00 : f32
    %33 = vector.broadcast %cst_12 : f32 to vector<8x128xf32>
    %34 = arith.select %10, %32, %33 : vector<8x128xi1>, vector<8x128xf32>
    %35 = arith.addf %5, %34 : vector<8x128xf32>
    %c64_i32_13 = arith.constant 64 : i32
    %36 = vector.broadcast %c64_i32_13 : i32 to vector<8x128xi32>
    %37 = arith.cmpi sge, %4, %36 : vector<8x128xi32>
    %c128_i32 = arith.constant 128 : i32
    %38 = vector.broadcast %c128_i32 : i32 to vector<8x128xi32>
    %39 = arith.cmpi slt, %4, %38 : vector<8x128xi32>
    %40 = arith.andi %37, %39 : vector<8x128xi1>
    %cst_14 = arith.constant 0.000000e+00 : f32
    %41 = vector.broadcast %cst_14 : f32 to vector<8x128xf32>
    %42 = arith.select %40, %3, %41 : vector<8x128xi1>, vector<8x128xf32>
    %cst_15 = arith.constant dense<0.000000e+00> : vector<8xf32>
    %43 = vector.multi_reduction <add>, %42, %cst_15 [1] : vector<8x128xf32> to vector<8xf32>
    %44 = vector.shape_cast %43 : vector<8xf32> to vector<8x1xf32>
    %cst_16 = arith.constant 1.562500e-02 : f32
    %45 = vector.broadcast %cst_16 : f32 to vector<8x1xf32>
    %46 = arith.mulf %44, %45 : vector<8x1xf32>
    %47 = arith.mulf %42, %42 : vector<8x128xf32>
    %cst_17 = arith.constant dense<0.000000e+00> : vector<8xf32>
    %48 = vector.multi_reduction <add>, %47, %cst_17 [1] : vector<8x128xf32> to vector<8xf32>
    %49 = vector.shape_cast %48 : vector<8xf32> to vector<8x1xf32>
    %cst_18 = arith.constant 1.562500e-02 : f32
    %50 = vector.broadcast %cst_18 : f32 to vector<8x1xf32>
    %51 = arith.mulf %49, %50 : vector<8x1xf32>
    %52 = arith.mulf %46, %46 : vector<8x1xf32>
    %53 = arith.subf %51, %52 : vector<8x1xf32>
    %cst_19 = arith.constant 0.000000e+00 : f32
    %54 = vector.broadcast %cst_19 : f32 to vector<8x1xf32>
    %55 = arith.maximumf %53, %54 : vector<8x1xf32>
    %cst_20 = arith.constant 9.99999974E-6 : f32
    %56 = vector.broadcast %cst_20 : f32 to vector<8x1xf32>
    %57 = arith.addf %55, %56 : vector<8x1xf32>
    %58 = math.rsqrt %57 : vector<8x1xf32>
    %59 = vector.broadcast %46 : vector<8x1xf32> to vector<8x128xf32>
    %60 = arith.subf %3, %59 : vector<8x128xf32>
    %61 = vector.broadcast %58 : vector<8x1xf32> to vector<8x128xf32>
    %62 = arith.mulf %60, %61 : vector<8x128xf32>
    %cst_21 = arith.constant 0.000000e+00 : f32
    %63 = vector.broadcast %cst_21 : f32 to vector<8x128xf32>
    %64 = arith.select %40, %62, %63 : vector<8x128xi1>, vector<8x128xf32>
    %65 = arith.addf %35, %64 : vector<8x128xf32>
    %cst_22 = arith.constant 2.000000e-01 : f32
    %66 = vector.broadcast %cst_22 : f32 to vector<8x128xf32>
    %67 = arith.mulf %66, %65 : vector<8x128xf32>
    %68 = arith.maximumf %65, %67 : vector<8x128xf32>
    %69 = arith.truncf %68 : vector<8x128xf32> to vector<8x128xbf16>
    %c0_23 = arith.constant 0 : index
    %c0_24 = arith.constant 0 : index
    %c0_25 = arith.constant 0 : index
    %70 = vector.load %arg3[%c0_23, %c0_24, %c0_25] : memref<1x8x128xbf16, #tpu.memory_space<vmem>>, vector<1x8x128xbf16>
    %71 = vector.shape_cast %70 : vector<1x8x128xbf16> to vector<8x128xbf16>
    %72 = vector.shape_cast %69 : vector<8x128xbf16> to vector<1x8x128xbf16>
    tpu.vector_store %arg3[%c0_23, %c0_24, %c0_25], %72 {strides = array<i32>} : memref<1x8x128xbf16, #tpu.memory_space<vmem>>, vector<1x8x128xbf16>,
    return
  }
  func.func @transform_0(%arg0: i32) -> (i32, i32, i32) {
    %c0_i32 = arith.constant 0 : i32
    %c0_i32_0 = arith.constant 0 : i32
    %c0_i32_1 = arith.constant 0 : i32
    return %arg0, %c0_i32, %c0_i32_0 : i32, i32, i32
  }
  func.func @transform_1(%arg0: i32) -> (i32, i32) {
    %c0_i32 = arith.constant 0 : i32
    %c0_i32_0 = arith.constant 0 : i32
    %c0_i32_1 = arith.constant 0 : i32
    return %c0_i32, %c0_i32_0 : i32, i32
  }
  func.func @transform_2(%arg0: i32) -> (i32, i32, i32) {
    %c0_i32 = arith.constant 0 : i32
    %c0_i32_0 = arith.constant 0 : i32
    %c0_i32_1 = arith.constant 0 : i32
    return %arg0, %c0_i32, %c0_i32_0 : i32, i32, i32
  }
}

</mosaic_0001>

<llo_original>
// kernel: tpu_custom_call.1
$region0: #{tpu_custom_call.1}
  #allocation0 [shape = 'u32[]', space=smem, size = 0x4, offset = 0x4, fixed_abs, tag = 'smem constant byte address 0x4 - core index']
  #allocation1 [shape = 'u32[144,128]{1,0:T(1,128)}', space=vmem, size = 0x12000, scoped, tag = 'internal scratch']
  %s0 = inlined_call_operand.hbm [shape: bf16[1,64,128], index: 0, kind: input, shape index: {}]
  %s1 = inlined_call_operand.hbm [shape: bf16[8,64], index: 1, kind: input, shape index: {}]
  %s2 = inlined_call_operand.hbm [shape: bf16[1,8,128], index: 2, kind: output, shape index: {}]
  %s3 = sld [smem:[#allocation0]]
  $region26: #{tpu_custom_call.1} parent=0
    _
  %s5 = ssub.s32 1, %s3
  %s6 = scalar_select 0, %s5, %s3
  $region1: #{tpu_custom_call.1} parent=0
    #allocation2 [shape = 'u8[16384]{0}', space=vmem, size = 0x4000, scoped, tag = 'input window, operand 0, single buffered']
    #allocation3 [shape = 's32[1]{0}', space=sflag, size = 0x4, scoped, tag = 'scoped memory for tpu_custom_call.1']
    #allocation4 [shape = 's32[1]{0}', space=sflag, size = 0x4, scoped, tag = 'scoped memory for tpu_custom_call.1']
    #allocation5 [shape = 'u8[2048]{0}', space=vmem, size = 0x800, scoped, tag = 'input window, operand 1, single buffered']
    #allocation6 [shape = 's32[1]{0}', space=sflag, size = 0x4, scoped, tag = 'scoped memory for tpu_custom_call.1']
    #allocation7 [shape = 'u8[2048]{0}', space=vmem, size = 0x800, scoped, tag = 'output window, operand 0, single buffered']
    %7 = vsyncpa [#allocation3], 0
    %8 = vsyncpa [#allocation6], 0
    %9 = vsyncpa [#allocation4], 0
    // Predicated region
    $region2: #{tpu_custom_call.1} parent=1 // pred_check
      _
    $region3: #{tpu_custom_call.1} parent=1 // pred_check_branch
      %11 = sbr.rel (0) target = $region5
    $region4: #{tpu_custom_call.1} parent=1 // pred_region
      %s13 = ssub.s32 512, 512
      %14 = vsyncadd [#allocation3], %s13
      %s15 = sshll.u32 [#allocation2], 4
      %s16 = int_to_ptr.vmem [resolvable:$true] %s15
      %21 = dma.hbm_to_vmem [thread:$0]  %s0, 512, %s16, [#allocation3], 64, 64, 4
    $region5: #{tpu_custom_call.1} parent=1 // pred_fallthru
      _
    // Predicated region
    $region6: #{tpu_custom_call.1} parent=1 // pred_check
      _
    $region7: #{tpu_custom_call.1} parent=1 // pred_check_branch
      %23 = sbr.rel (0) target = $region9
    $region8: #{tpu_custom_call.1} parent=1 // pred_region
      %s25 = ssub.s32 64, 64
      %26 = vsyncadd [#allocation6], %s25
      %s28 = sshll.u32 [#allocation5], 4
      %s29 = int_to_ptr.vmem [resolvable:$true] %s28
      %31 = dma.hbm_to_vmem [thread:$0]  %s1, 64, %s29, [#allocation6]
    $region9: #{tpu_custom_call.1} parent=1 // pred_fallthru
      _
    // Predicated region
    $region10: #{tpu_custom_call.1} parent=1 // pred_check
      _
    $region11: #{tpu_custom_call.1} parent=1 // pred_check_branch
      %33 = sbr.rel (0) target = $region13
    $region12: #{tpu_custom_call.1} parent=1 // pred_region
      %34 = dma.done [#allocation3], 512
    $region13: #{tpu_custom_call.1} parent=1 // pred_fallthru
      _
    // Predicated region
    $region14: #{tpu_custom_call.1} parent=1 // pred_check
      _
    $region15: #{tpu_custom_call.1} parent=1 // pred_check_branch
      %36 = sbr.rel (0) target = $region17
    $region16: #{tpu_custom_call.1} parent=1 // pred_region
      %37 = dma.done [#allocation6], 64
    $region17: #{tpu_custom_call.1} parent=1 // pred_fallthru
      _
    %v39 = vld [vmem:[#allocation5] sm:$0xf]
    %v40 = vld [vmem:[#allocation2] sm:$0xf]
    %v41 = vld [vmem:[#allocation2 + $0x4] sm:$0xf]
    %v42 = vld [vmem:[#allocation2 + $0x8] sm:$0xf]
    %v43 = vld [vmem:[#allocation2 + $0xc] sm:$0xf]
    %v44 = vld [vmem:[#allocation2 + $0x10] sm:$0xf]
    %v45 = vld [vmem:[#allocation2 + $0x14] sm:$0xf]
    %v46 = vld [vmem:[#allocation2 + $0x18] sm:$0xf]
    %v47 = vld [vmem:[#allocation2 + $0x1c] sm:$0xf]
    %v56 = vunpack.c.l.b16 %v40
    %v57 = vunpack.c.l.b16 %v41
    %v58 = vunpack.c.l.b16 %v42
    %v59 = vunpack.c.l.b16 %v43
    %v60 = vunpack.c.l.b16 %v44
    %v61 = vunpack.c.l.b16 %v45
    %v62 = vunpack.c.l.b16 %v46
    %v63 = vunpack.c.l.b16 %v47
    %v64 = vpack.c.b16 %v57, %v56
    %v65 = vpack.c.b16 %v59, %v58
    %v66 = vpack.c.b16 %v61, %v60
    %v67 = vpack.c.b16 %v63, %v62
    %vm72 = vcmask 523264
    %v74 = vsel %vm72, %v39, 0
    %76 = vmatprep.subr.bf16.mxu0 0
    %77 = vmatpush1.bf16.msra.mxu0 0
    %78 = vmatprep.subr.bf16.mxu0 0
    %79 = vmatpush1.bf16.msra.mxu0 0
    %80 = vmatprep.subr.bf16.mxu0 0
    %81 = vmatpush1.bf16.msra.mxu0 0
    %82 = vmatprep.subr.bf16.mxu0 0
    %83 = vmatpush1.bf16.msra.mxu0 0
    %84 = vmatprep.subr.bf16.mxu0 0
    %85 = vmatpush1.bf16.msra.mxu0 %v67
    %86 = vmatprep.subr.bf16.mxu0 0
    %87 = vmatpush1.bf16.msra.mxu0 %v66
    %88 = vmatprep.subr.bf16.mxu0 0
    %89 = vmatpush1.bf16.msra.mxu0 %v65
    %90 = vmatprep.subr.bf16.mxu0 0
    %91 = vmatpush1.bf16.msra.mxu0 %v64
    %92 = vmatprep.subr.bf16.mxu0 0
    %93 = vmatpush2.bf16.msra.mxu0 0
    %94 = vmatprep.subr.bf16.mxu0 0
    %95 = vmatpush2.bf16.msra.mxu0 0
    %96 = vmatprep.subr.bf16.mxu0 0
    %97 = vmatpush2.bf16.msra.mxu0 0
    %98 = vmatprep.subr.bf16.mxu0 0
    %99 = vmatpush2.bf16.msra.mxu0 0
    %100 = vmatprep.subr.bf16.mxu0 0
    %101 = vmatpush2.bf16.msra.mxu0 0
    %102 = vmatprep.subr.bf16.mxu0 0
    %103 = vmatpush2.bf16.msra.mxu0 0
    %104 = vmatprep.subr.bf16.mxu0 0
    %105 = vmatpush2.bf16.msra.mxu0 0
    %106 = vmatprep.subr.bf16.mxu0 0
    %107 = vmatpush2.bf16.msra.mxu0 0
    %108 = vmatprep.mubr.bf16.mxu0 0
    %109 = vmatmul.mubr.bf16.gmra.mxu0 %v74
    %v110 = vpop.f32.mrf.mxu0
    %v111 = vadd.f32 0.0, %v110
    %v112 = vpop.f32.mrf.mxu0
    %v113 = vpop.f32.mrf.mxu0
    %v114 = vpop.f32.mrf.mxu0
    %115 = vdwg.mxu0
    %v116 = vlaneseq
    %v117 = vand.u32 %v116, 127
    %vm118 = vcmp.ge.s32.totalorder %v117, 0
    %vm119 = vcmp.lt.s32.totalorder %v117, 64
    %vm120 = vmand %vm118, %vm119
    %v121 = vsel %vm120, %v111, 0.0
    %122 = vadd.xlane.f32.xlu0 %v121
    %v123 = vpop.xlane.xlu0 %122
    %v124 = vmul.f32 %v123, 0.015625
    %v125 = vmul.f32 %v121, %v121
    %126 = vadd.xlane.f32.xlu0 %v125
    %v127 = vpop.xlane.xlu0 %126
    %v128 = vmul.f32 %v127, 0.015625
    %v129 = vmul.f32 %v124, %v124
    %v130 = vsub.f32 %v128, %v129
    %v131 = vmax.f32 %v130, 0.0
    %v132 = vadd.f32 %v131, 1e-05
    %v133 = vrsqrt.pop %v132
    %v134 = vsub.f32 %v111, %v124
    %v135 = vmul.f32 %v134, %v133
    %v136 = vsel %vm120, %v135, 0.0
    %v137 = vadd.f32 %v136, 0.0
    %vm138 = vcmp.ge.s32.totalorder %v117, 64
    %vm139 = vcmp.lt.s32.totalorder %v117, 128
    %vm140 = vmand %vm138, %vm139
    %v141 = vsel %vm140, %v111, 0.0
    %142 = vadd.xlane.f32.xlu0 %v141
    %v143 = vpop.xlane.xlu0 %142
    %v144 = vmul.f32 %v143, 0.015625
    %v145 = vmul.f32 %v141, %v141
    %146 = vadd.xlane.f32.xlu0 %v145
    %v147 = vpop.xlane.xlu0 %146
    %v148 = vmul.f32 %v147, 0.015625
    %v149 = vmul.f32 %v144, %v144
    %v150 = vsub.f32 %v148, %v149
    %v151 = vmax.f32 %v150, 0.0
    %v152 = vadd.f32 %v151, 1e-05
    %v153 = vrsqrt.pop %v152
    %v154 = vsub.f32 %v111, %v144
    %v155 = vmul.f32 %v154, %v153
    %v156 = vsel %vm140, %v155, 0.0
    %v157 = vadd.f32 %v137, %v156
    %v158 = vmul.f32 %v157, 0.2
    %v159 = vmax.f32 %v157, %v158
    %v160 = vpack.c.bf16 %v159, %v159
    %161 = vst [vmem:[#allocation7] sm:$0xf] %v160
    // Predicated region
    $region18: #{tpu_custom_call.1} parent=1 // pred_check
      _
    $region19: #{tpu_custom_call.1} parent=1 // pred_check_branch
      %163 = sbr.rel (0) target = $region21
    $region20: #{tpu_custom_call.1} parent=1 // pred_region
      %s165 = ssub.s32 64, 64
      %166 = vsyncadd [#allocation4], %s165
      %s168 = sshll.u32 [#allocation7], 4
      %s169 = int_to_ptr.vmem [resolvable:$true] %s168
      %171 = dma.vmem_to_hbm [thread:$0]  %s169, 64, %s2, [#allocation4]
    $region21: #{tpu_custom_call.1} parent=1 // pred_fallthru
      _
    // Predicated region
    $region22: #{tpu_custom_call.1} parent=1 // pred_check
      _
    $region23: #{tpu_custom_call.1} parent=1 // pred_check_branch
      %173 = sbr.rel (0) target = $region25
    $region24: #{tpu_custom_call.1} parent=1 // pred_region
      %174 = dma.done [#allocation4], 64
    $region25: #{tpu_custom_call.1} parent=1 // pred_fallthru
      _
    %175 = vsyncpa [#allocation3], 1
    %176 = vsyncpa [#allocation6], 1
    %177 = vsyncpa [#allocation4], 1

</llo_original>
